<compile_context>
chip_gen: v7x
topology: tpu7x:2x2x1
jax: 0.10.0
libtpu: 0.0.40
codegen_flags: <defaults>
</compile_context>

<pallas_src>
import functools
import math

import jax
import jax.numpy as jnp
from jax.experimental import pallas as pl
from jax.experimental.pallas import tpu as pltpu


def _mlp_kernel(x_ref, w1_ref, b1_ref, w2_ref, b2_ref, w3_ref, b3_ref, o_ref):
    # x_ref: [2, TILE_B] -- batch on the lane axis.
    x = x_ref[...]

    # Layer 1: Linear(2 -> 16) + ReLU.  K=2 matmul is pure MXU latency; do it
    # as two broadcast FMAs on the VPU instead.
    h1 = (w1_ref[:, 0:1] * x[0:1, :]
          + w1_ref[:, 1:2] * x[1:2, :]
          + b1_ref[...])                                          # [16, TILE_B]
    h1 = jnp.maximum(h1, 0.0)

    # Layer 2: Linear(16 -> 32) + ReLU  (MXU, N = TILE_B, lane-dense).
    h2 = jnp.dot(w2_ref[...], h1, preferred_element_type=jnp.float32) + b2_ref[...]
    h2 = jnp.maximum(h2, 0.0)                                     # [32, TILE_B]

    # Layer 3: Linear(32 -> 2)  (MXU; M=2 is small but N = TILE_B keeps it cheap).
    out = jnp.dot(w3_ref[...], h2, preferred_element_type=jnp.float32) + b3_ref[...]
    o_ref[...] = out.astype(o_ref.dtype)                          # [2, TILE_B]


@functools.partial(jax.jit, static_argnames=("tile_b",))
def generator_forward(x, params, *, tile_b=2048):
    """Fused MLP forward.  x: [batch, 2] float32 -> [batch, 2] float32."""
    w1, b1, w2, b2, w3, b3 = params
    batch = x.shape[0]

    # Batch lives on the lane axis -> tile must be a multiple of 128; use a
    # multiple of 256 so the MXU N dim fills full 256-wide passes (v6e/v7x).
    tile_b = max(256, min(int(tile_b) // 256 * 256, pl.cdiv(batch, 256) * 256))
    padded = pl.cdiv(batch, tile_b) * tile_b

    # Wrapper-side transpose/pad = layout plumbing to present lane-dense tiles.
    x_t = jnp.transpose(x)                                        # [2, batch]
    if padded != batch:
        x_t = jnp.pad(x_t, ((0, 0), (0, padded - batch)))

    grid = (padded // tile_b,)

    # x / out: stream batch tiles along the lane axis.
    stream = lambda shape: pl.BlockSpec(shape, lambda i: (0, i))
    # weights / biases: same block every step -> stay VMEM-resident.
    resident = lambda shape: pl.BlockSpec(shape, lambda i: (0, 0))

    flops = 2 * padded * (2 * 16 + 16 * 32 + 32 * 2)
    bytes_accessed = padded * (2 + 2) * 4 + sum(int(p.size) * 4 for p in params)

    out_t = pl.pallas_call(
        _mlp_kernel,
        out_shape=jax.ShapeDtypeStruct((2, padded), jnp.float32),
        grid=grid,
        in_specs=[
            stream((2, tile_b)),
            resident(w1.shape), resident(b1.shape),
            resident(w2.shape), resident(b2.shape),
            resident(w3.shape), resident(b3.shape),
        ],
        out_specs=stream((2, tile_b)),
        compiler_params=pltpu.CompilerParams(
            dimension_semantics=("parallel",),
            vmem_limit_bytes=64 * 1024 * 1024,
        ),
        cost_estimate=pl.CostEstimate(
            flops=flops, transcendentals=0, bytes_accessed=bytes_accessed),
    )(x_t, w1, b1, w2, b2, w3, b3)

    return jnp.transpose(out_t)[:batch]


def init_params(key):
    """PyTorch nn.Linear default init: W, b ~ U(-1/sqrt(fan_in), 1/sqrt(fan_in)).
    Weights are stored PyTorch-native [out, in]; biases as [out, 1] so they
    broadcast along the lane (batch) axis inside the kernel."""
    dims = [(2, 16), (16, 32), (32, 2)]
    params = []
    for fan_in, fan_out in dims:
        key, kw, kb = jax.random.split(key, 3)
        bound = 1.0 / math.sqrt(fan_in)
        w = jax.random.uniform(kw, (fan_out, fan_in), jnp.float32, -bound, bound)
        b = jax.random.uniform(kb, (fan_out, 1), jnp.float32, -bound, bound)
        params += [w, b]
    return tuple(params)


def reference_forward(x, params):
    """Pure-JAX reference for correctness check (x: [batch, 2])."""
    w1, b1, w2, b2, w3, b3 = params
    h1 = jnp.maximum(x @ w1.T + b1[:, 0], 0.0)
    h2 = jnp.maximum(h1 @ w2.T + b2[:, 0], 0.0)
    return h2 @ w3.T + b3[:, 0]


if __name__ == "__main__":
    key = jax.random.PRNGKey(0)
    key, kx = jax.random.split(key)

    batch = 8
    x = jax.random.normal(kx, (batch, 2), jnp.float32)
    params = init_params(key)

    out = generator_forward(x, params)
    out = jax.block_until_ready(out)

    ref = reference_forward(x, params)
    assert out.shape == (batch, 2), out.shape
    assert jnp.allclose(out, ref, atol=1e-5, rtol=1e-5), (
        f"max abs err = {jnp.max(jnp.abs(out - ref))}"
    )

    print("KERNEL_OK")
</pallas_src>

<mosaic_0001>
module attributes {stable_mosaic.version = 11 : i64} {
  func.func @_mlp_kernel(%arg0: i32, %arg1: memref<2x256xf32, #tpu.memory_space<vmem>>, %arg2: memref<16x2xf32, #tpu.memory_space<vmem>>, %arg3: memref<16x1xf32, #tpu.memory_space<vmem>>, %arg4: memref<32x16xf32, #tpu.memory_space<vmem>>, %arg5: memref<32x1xf32, #tpu.memory_space<vmem>>, %arg6: memref<2x32xf32, #tpu.memory_space<vmem>>, %arg7: memref<2x1xf32, #tpu.memory_space<vmem>>, %arg8: memref<2x256xf32, #tpu.memory_space<vmem>>) attributes {dimension_semantics = [#tpu.dimension_semantics<parallel>], iteration_bounds = array<i64: 1>, scalar_prefetch = 0 : i64, scratch_operands = 0 : i64, tpu.core_type = #tpu.core_type<tc>, window_params = [{transform_indices = @transform_0, window_bounds = array<i64: 2, 256>}, {pipeline_mode = #tpu.pipeline_mode<synchronous>, transform_indices = @transform_1, window_bounds = array<i64: 16, 2>}, {pipeline_mode = #tpu.pipeline_mode<synchronous>, transform_indices = @transform_2, window_bounds = array<i64: 16, 1>}, {pipeline_mode = #tpu.pipeline_mode<synchronous>, transform_indices = @transform_3, window_bounds = array<i64: 32, 16>}, {pipeline_mode = #tpu.pipeline_mode<synchronous>, transform_indices = @transform_4, window_bounds = array<i64: 32, 1>}, {pipeline_mode = #tpu.pipeline_mode<synchronous>, transform_indices = @transform_5, window_bounds = array<i64: 2, 32>}, {pipeline_mode = #tpu.pipeline_mode<synchronous>, transform_indices = @transform_6, window_bounds = array<i64: 2, 1>}, {transform_indices = @transform_7, window_bounds = array<i64: 2, 256>}]} {
    %c0 = arith.constant 0 : index
    %c0_0 = arith.constant 0 : index
    %0 = vector.load %arg1[%c0, %c0_0] : memref<2x256xf32, #tpu.memory_space<vmem>>, vector<2x256xf32>
    %c0_1 = arith.constant 0 : index
    %c0_2 = arith.constant 0 : index
    %1 = vector.load %arg2[%c0_1, %c0_2] : memref<16x2xf32, #tpu.memory_space<vmem>>, vector<16x1xf32>
    %2 = vector.extract_strided_slice %0 {offsets = [0, 0], sizes = [1, 256], strides = [1, 1]} : vector<2x256xf32> to vector<1x256xf32>
    %3 = vector.broadcast %1 : vector<16x1xf32> to vector<16x256xf32>
    %4 = vector.broadcast %2 : vector<1x256xf32> to vector<16x256xf32>
    %5 = arith.mulf %3, %4 : vector<16x256xf32>
    %c0_3 = arith.constant 0 : index
    %c1 = arith.constant 1 : index
    %6 = vector.load %arg2[%c0_3, %c1] : memref<16x2xf32, #tpu.memory_space<vmem>>, vector<16x1xf32>
    %7 = vector.extract_strided_slice %0 {offsets = [1, 0], sizes = [1, 256], strides = [1, 1]} : vector<2x256xf32> to vector<1x256xf32>
    %8 = vector.broadcast %6 : vector<16x1xf32> to vector<16x256xf32>
    %9 = vector.broadcast %7 : vector<1x256xf32> to vector<16x256xf32>
    %10 = arith.mulf %8, %9 : vector<16x256xf32>
    %11 = arith.addf %5, %10 : vector<16x256xf32>
    %c0_4 = arith.constant 0 : index
    %c0_5 = arith.constant 0 : index
    %12 = vector.load %arg3[%c0_4, %c0_5] : memref<16x1xf32, #tpu.memory_space<vmem>>, vector<16x1xf32>
    %13 = vector.broadcast %12 : vector<16x1xf32> to vector<16x256xf32>
    %14 = arith.addf %11, %13 : vector<16x256xf32>
    %cst = arith.constant 0.000000e+00 : f32
    %15 = vector.broadcast %cst : f32 to vector<16x256xf32>
    %16 = arith.maximumf %14, %15 : vector<16x256xf32>
    %c0_6 = arith.constant 0 : index
    %c0_7 = arith.constant 0 : index
    %17 = vector.load %arg4[%c0_6, %c0_7] : memref<32x16xf32, #tpu.memory_space<vmem>>, vector<32x16xf32>
    %cst_8 = arith.constant dense<0.000000e+00> : vector<32x256xf32>
    %18 = tpu.matmul %17, %16, %cst_8 {dimension_numbers = #tpu.dot_dimension_numbers<[1], [0], [0], [1], [0, 0, 1, 1], [], []>} : vector<32x16xf32>, vector<16x256xf32>, vector<32x256xf32> -> vector<32x256xf32>
    %c0_9 = arith.constant 0 : index
    %c0_10 = arith.constant 0 : index
    %19 = vector.load %arg5[%c0_9, %c0_10] : memref<32x1xf32, #tpu.memory_space<vmem>>, vector<32x1xf32>
    %20 = vector.broadcast %19 : vector<32x1xf32> to vector<32x256xf32>
    %21 = arith.addf %18, %20 : vector<32x256xf32>
    %cst_11 = arith.constant 0.000000e+00 : f32
    %22 = vector.broadcast %cst_11 : f32 to vector<32x256xf32>
    %23 = arith.maximumf %21, %22 : vector<32x256xf32>
    %c0_12 = arith.constant 0 : index
    %c0_13 = arith.constant 0 : index
    %24 = vector.load %arg6[%c0_12, %c0_13] : memref<2x32xf32, #tpu.memory_space<vmem>>, vector<2x32xf32>
    %cst_14 = arith.constant dense<0.000000e+00> : vector<2x256xf32>
    %25 = tpu.matmul %24, %23, %cst_14 {dimension_numbers = #tpu.dot_dimension_numbers<[1], [0], [0], [1], [0, 0, 1, 1], [], []>} : vector<2x32xf32>, vector<32x256xf32>, vector<2x256xf32> -> vector<2x256xf32>
    %c0_15 = arith.constant 0 : index
    %c0_16 = arith.constant 0 : index
    %26 = vector.load %arg7[%c0_15, %c0_16] : memref<2x1xf32, #tpu.memory_space<vmem>>, vector<2x1xf32>
    %27 = vector.broadcast %26 : vector<2x1xf32> to vector<2x256xf32>
    %28 = arith.addf %25, %27 : vector<2x256xf32>
    %c0_17 = arith.constant 0 : index
    %c0_18 = arith.constant 0 : index
    %29 = vector.load %arg8[%c0_17, %c0_18] : memref<2x256xf32, #tpu.memory_space<vmem>>, vector<2x256xf32>
    tpu.vector_store %arg8[%c0_17, %c0_18], %28 {strides = array<i32>} : memref<2x256xf32, #tpu.memory_space<vmem>>, vector<2x256xf32>,
    return
  }
  func.func @transform_0(%arg0: i32) -> (i32, i32) {
    %c0_i32 = arith.constant 0 : i32
    %c0_i32_0 = arith.constant 0 : i32
    return %c0_i32, %arg0 : i32, i32
  }
  func.func @transform_1(%arg0: i32) -> (i32, i32) {
    %c0_i32 = arith.constant 0 : i32
    %c0_i32_0 = arith.constant 0 : i32
    %c0_i32_1 = arith.constant 0 : i32
    return %c0_i32, %c0_i32_0 : i32, i32
  }
  func.func @transform_2(%arg0: i32) -> (i32, i32) {
    %c0_i32 = arith.constant 0 : i32
    %c0_i32_0 = arith.constant 0 : i32
    %c0_i32_1 = arith.constant 0 : i32
    return %c0_i32, %c0_i32_0 : i32, i32
  }
  func.func @transform_3(%arg0: i32) -> (i32, i32) {
    %c0_i32 = arith.constant 0 : i32
    %c0_i32_0 = arith.constant 0 : i32
    %c0_i32_1 = arith.constant 0 : i32
    return %c0_i32, %c0_i32_0 : i32, i32
  }
  func.func @transform_4(%arg0: i32) -> (i32, i32) {
    %c0_i32 = arith.constant 0 : i32
    %c0_i32_0 = arith.constant 0 : i32
    %c0_i32_1 = arith.constant 0 : i32
    return %c0_i32, %c0_i32_0 : i32, i32
  }
  func.func @transform_5(%arg0: i32) -> (i32, i32) {
    %c0_i32 = arith.constant 0 : i32
    %c0_i32_0 = arith.constant 0 : i32
    %c0_i32_1 = arith.constant 0 : i32
    return %c0_i32, %c0_i32_0 : i32, i32
  }
  func.func @transform_6(%arg0: i32) -> (i32, i32) {
    %c0_i32 = arith.constant 0 : i32
    %c0_i32_0 = arith.constant 0 : i32
    %c0_i32_1 = arith.constant 0 : i32
    return %c0_i32, %c0_i32_0 : i32, i32
  }
  func.func @transform_7(%arg0: i32) -> (i32, i32) {
    %c0_i32 = arith.constant 0 : i32
    %c0_i32_0 = arith.constant 0 : i32
    return %c0_i32, %arg0 : i32, i32
  }
}

</mosaic_0001>

<llo_original>
// kernel: generator_forward.1
$region0: #{generator_forward.1}
  #allocation0 [shape = 'u32[]', space=smem, size = 0x4, offset = 0x4, fixed_abs, tag = 'smem constant byte address 0x4 - core index']
  #allocation1 [shape = 'u32[144,128]{1,0:T(1,128)}', space=vmem, size = 0x12000, scoped, tag = 'internal scratch']
  %s0 = inlined_call_operand.hbm [shape: f32[2,256], index: 0, kind: input, shape index: {}]
  %s1 = inlined_call_operand.hbm [shape: f32[16,2], index: 1, kind: input, shape index: {}]
  %s2 = inlined_call_operand.hbm [shape: f32[16,1], index: 2, kind: input, shape index: {}]
  %s3 = inlined_call_operand.hbm [shape: f32[32,16], index: 3, kind: input, shape index: {}]
  %s4 = inlined_call_operand.hbm [shape: f32[32,1], index: 4, kind: input, shape index: {}]
  %s5 = inlined_call_operand.hbm [shape: f32[2,32], index: 5, kind: input, shape index: {}]
  %s6 = inlined_call_operand.hbm [shape: f32[2,1], index: 6, kind: input, shape index: {}]
  %s7 = inlined_call_operand.hbm [shape: f32[2,256], index: 7, kind: output, shape index: {}]
  %s8 = sld [smem:[#allocation0]]
  $region66: #{generator_forward.1} parent=0
    _
  %s10 = ssub.s32 1, %s8
  %s11 = scalar_select 0, %s10, %s8
  $region1: #{generator_forward.1} parent=0
    #allocation2 [shape = 'u8[2048]{0}', space=vmem, size = 0x800, scoped, tag = 'input window, operand 0, single buffered']
    #allocation3 [shape = 's32[1]{0}', space=sflag, size = 0x4, scoped, tag = 'scoped memory for generator_forward.1']
    #allocation4 [shape = 's32[1]{0}', space=sflag, size = 0x4, scoped, tag = 'scoped memory for generator_forward.1']
    #allocation5 [shape = 'u8[8192]{0}', space=vmem, size = 0x2000, scoped, tag = 'input window, operand 1, single buffered']
    #allocation6 [shape = 's32[1]{0}', space=sflag, size = 0x4, scoped, tag = 'scoped memory for generator_forward.1']
    #allocation7 [shape = 'u8[8192]{0}', space=vmem, size = 0x2000, scoped, tag = 'input window, operand 2, single buffered']
    #allocation8 [shape = 'u8[16384]{0}', space=vmem, size = 0x4000, scoped, tag = 'input window, operand 3, single buffered']
    #allocation9 [shape = 's32[1]{0}', space=sflag, size = 0x4, scoped, tag = 'scoped memory for generator_forward.1']
    #allocation10 [shape = 'u8[16384]{0}', space=vmem, size = 0x4000, scoped, tag = 'input window, operand 4, single buffered']
    #allocation11 [shape = 'u8[1024]{0}', space=vmem, size = 0x400, scoped, tag = 'input window, operand 5, single buffered']
    #allocation12 [shape = 's32[1]{0}', space=sflag, size = 0x4, scoped, tag = 'scoped memory for generator_forward.1']
    #allocation13 [shape = 'u8[1024]{0}', space=vmem, size = 0x400, scoped, tag = 'input window, operand 6, single buffered']
    #allocation14 [shape = 'u8[2048]{0}', space=vmem, size = 0x800, scoped, tag = 'output window, operand 0, single buffered']
    %12 = vsyncpa [#allocation3], 0
    %13 = vsyncpa [#allocation6], 0
    %14 = vsyncpa [#allocation9], 0
    %15 = vsyncpa [#allocation12], 0
    %16 = vsyncpa [#allocation4], 0
    // Predicated region
    $region2: #{generator_forward.1} parent=1 // pred_check
      _
    $region3: #{generator_forward.1} parent=1 // pred_check_branch
      %18 = sbr.rel (0) target = $region5
    $region4: #{generator_forward.1} parent=1 // pred_region
      %s20 = ssub.s32 64, 64
      %21 = vsyncadd [#allocation3], %s20
      %s23 = sshll.u32 [#allocation2], 4
      %s24 = int_to_ptr.vmem [resolvable:$true] %s23
      %26 = dma.hbm_to_vmem [thread:$0]  %s0, 64, %s24, [#allocation3]
    $region5: #{generator_forward.1} parent=1 // pred_fallthru
      _
    // Predicated region
    $region6: #{generator_forward.1} parent=1 // pred_check
      _
    $region7: #{generator_forward.1} parent=1 // pred_check_branch
      %28 = sbr.rel (0) target = $region9
    $region8: #{generator_forward.1} parent=1 // pred_region
      %s30 = ssub.s32 256, 256
      %31 = vsyncadd [#allocation6], %s30
      %s32 = sshll.u32 [#allocation5], 4
      %s33 = int_to_ptr.vmem [resolvable:$true] %s32
      %38 = dma.hbm_to_vmem [thread:$0]  %s1, 256, %s33, [#allocation6], 128, 128, 8
    $region9: #{generator_forward.1} parent=1 // pred_fallthru
      _
    // Predicated region
    $region10: #{generator_forward.1} parent=1 // pred_check
      _
    $region11: #{generator_forward.1} parent=1 // pred_check_branch
      %40 = sbr.rel (0) target = $region13
    $region12: #{generator_forward.1} parent=1 // pred_region
      %s42 = ssub.s32 256, 256
      %43 = vsyncadd [#allocation6], %s42
      %s44 = sshll.u32 [#allocation7], 4
      %s45 = int_to_ptr.vmem [resolvable:$true] %s44
      %50 = dma.hbm_to_vmem [thread:$0]  %s2, 256, %s45, [#allocation6], 128, 128, 8
    $region13: #{generator_forward.1} parent=1 // pred_fallthru
      _
    // Predicated region
    $region14: #{generator_forward.1} parent=1 // pred_check
      _
    $region15: #{generator_forward.1} parent=1 // pred_check_branch
      %52 = sbr.rel (0) target = $region17
    $region16: #{generator_forward.1} parent=1 // pred_region
      %s54 = ssub.s32 512, 512
      %55 = vsyncadd [#allocation9], %s54
      %s56 = sshll.u32 [#allocation8], 4
      %s57 = int_to_ptr.vmem [resolvable:$true] %s56
      %62 = dma.hbm_to_vmem [thread:$0]  %s3, 512, %s57, [#allocation9], 128, 128, 8
    $region17: #{generator_forward.1} parent=1 // pred_fallthru
      _
    // Predicated region
    $region18: #{generator_forward.1} parent=1 // pred_check
      _
    $region19: #{generator_forward.1} parent=1 // pred_check_branch
      %64 = sbr.rel (0) target = $region21
    $region20: #{generator_forward.1} parent=1 // pred_region
      %s66 = ssub.s32 512, 512
      %67 = vsyncadd [#allocation9], %s66
      %s68 = sshll.u32 [#allocation10], 4
      %s69 = int_to_ptr.vmem [resolvable:$true] %s68
      %74 = dma.hbm_to_vmem [thread:$0]  %s4, 512, %s69, [#allocation9], 128, 128, 8
    $region21: #{generator_forward.1} parent=1 // pred_fallthru
      _
    // Predicated region
    $region22: #{generator_forward.1} parent=1 // pred_check
      _
    $region23: #{generator_forward.1} parent=1 // pred_check_branch
      %76 = sbr.rel (0) target = $region25
    $region24: #{generator_forward.1} parent=1 // pred_region
      %s78 = ssub.s32 32, 32
      %79 = vsyncadd [#allocation12], %s78
      %s81 = sshll.u32 [#allocation11], 4
      %s82 = int_to_ptr.vmem [resolvable:$true] %s81
      %84 = dma.hbm_to_vmem [thread:$0]  %s5, 32, %s82, [#allocation12]
    $region25: #{generator_forward.1} parent=1 // pred_fallthru
      _
    // Predicated region
    $region26: #{generator_forward.1} parent=1 // pred_check
      _
    $region27: #{generator_forward.1} parent=1 // pred_check_branch
      %86 = sbr.rel (0) target = $region29
    $region28: #{generator_forward.1} parent=1 // pred_region
      %s88 = ssub.s32 32, 32
      %89 = vsyncadd [#allocation12], %s88
      %s91 = sshll.u32 [#allocation13], 4
      %s92 = int_to_ptr.vmem [resolvable:$true] %s91
      %94 = dma.hbm_to_vmem [thread:$0]  %s6, 32, %s92, [#allocation12]
    $region29: #{generator_forward.1} parent=1 // pred_fallthru
      _
    // Predicated region
    $region30: #{generator_forward.1} parent=1 // pred_check
      _
    $region31: #{generator_forward.1} parent=1 // pred_check_branch
      %96 = sbr.rel (0) target = $region33
    $region32: #{generator_forward.1} parent=1 // pred_region
      %97 = dma.done [#allocation3], 64
    $region33: #{generator_forward.1} parent=1 // pred_fallthru
      _
    // Predicated region
    $region34: #{generator_forward.1} parent=1 // pred_check
      _
    $region35: #{generator_forward.1} parent=1 // pred_check_branch
      %99 = sbr.rel (0) target = $region37
    $region36: #{generator_forward.1} parent=1 // pred_region
      %100 = dma.done [#allocation6], 256
    $region37: #{generator_forward.1} parent=1 // pred_fallthru
      _
    // Predicated region
    $region38: #{generator_forward.1} parent=1 // pred_check
      _
    $region39: #{generator_forward.1} parent=1 // pred_check_branch
      %102 = sbr.rel (0) target = $region41
    $region40: #{generator_forward.1} parent=1 // pred_region
      %103 = dma.done [#allocation6], 256
    $region41: #{generator_forward.1} parent=1 // pred_fallthru
      _
    // Predicated region
    $region42: #{generator_forward.1} parent=1 // pred_check
      _
    $region43: #{generator_forward.1} parent=1 // pred_check_branch
      %105 = sbr.rel (0) target = $region45
    $region44: #{generator_forward.1} parent=1 // pred_region
      %106 = dma.done [#allocation9], 512
    $region45: #{generator_forward.1} parent=1 // pred_fallthru
      _
    // Predicated region
    $region46: #{generator_forward.1} parent=1 // pred_check
      _
    $region47: #{generator_forward.1} parent=1 // pred_check_branch
      %108 = sbr.rel (0) target = $region49
    $region48: #{generator_forward.1} parent=1 // pred_region
      %109 = dma.done [#allocation9], 512
    $region49: #{generator_forward.1} parent=1 // pred_fallthru
      _
    // Predicated region
    $region50: #{generator_forward.1} parent=1 // pred_check
      _
    $region51: #{generator_forward.1} parent=1 // pred_check_branch
      %111 = sbr.rel (0) target = $region53
    $region52: #{generator_forward.1} parent=1 // pred_region
      %112 = dma.done [#allocation12], 32
    $region53: #{generator_forward.1} parent=1 // pred_fallthru
      _
    // Predicated region
    $region54: #{generator_forward.1} parent=1 // pred_check
      _
    $region55: #{generator_forward.1} parent=1 // pred_check_branch
      %114 = sbr.rel (0) target = $region57
    $region56: #{generator_forward.1} parent=1 // pred_region
      %115 = dma.done [#allocation12], 32
    $region57: #{generator_forward.1} parent=1 // pred_fallthru
      _
    %v116 = vld [vmem:[#allocation2] sm:$0xf]
    %v117 = vld [vmem:[#allocation5] sm:$0xff]
    %v118 = vld [vmem:[#allocation5 + $0x8] sm:$0xff]
    %120 = vset.pattern.permute.xlu0 0
    %121 = vperm.xlu0 %120, %v117
    %v122 = vpop.permute.xlu0 %121
    %125 = vset.pattern.permute.xlu0 0
    %126 = vperm.xlu0 %125, %v118
    %v127 = vpop.permute.xlu0 %126
    %v130 = vlaneseq
    %v131 = vshrl.u32 %v130, 7
    %v132 = vsub.s32 0, %v131
    %v133 = vrot.slane %v116, %v132
    %v134 = vlaneseq
    %v135 = vshrl.u32 %v134, 7
    %v136 = vsub.s32 2, %v135
    %v137 = vrot.slane %v116, %v136
    %v140 = vlaneseq
    %v141 = vshrl.u32 %v140, 7
    %v142 = vsub.s32 0, %v141
    %v143 = vrot.slane %v133, %v142
    %v144 = vlaneseq
    %v145 = vshrl.u32 %v144, 7
    %v146 = vsub.s32 0, %v145
    %v147 = vrot.slane %v137, %v146
    %v148 = vmul.f32 %v122, %v143
    %v149 = vmul.f32 %v122, %v147
    %v150 = vmul.f32 %v127, %v143
    %v151 = vmul.f32 %v127, %v147
    %152 = vset.pattern.permute.xlu0 1
    %153 = vperm.xlu0 %152, %v117
    %v154 = vpop.permute.xlu0 %153
    %156 = vset.pattern.permute.xlu0 1
    %157 = vperm.xlu0 %156, %v118
    %v158 = vpop.permute.xlu0 %157
    %v160 = vlaneseq
    %v161 = vshrl.u32 %v160, 7
    %v162 = vsub.s32 1, %v161
    %v163 = vrot.slane %v116, %v162
    %v164 = vlaneseq
    %v165 = vshrl.u32 %v164, 7
    %v166 = vsub.s32 3, %v165
    %v167 = vrot.slane %v116, %v166
    %v170 = vlaneseq
    %v171 = vshrl.u32 %v170, 7
    %v172 = vsub.s32 1, %v171
    %v173 = vrot.slane %v163, %v172
    %v174 = vlaneseq
    %v175 = vshrl.u32 %v174, 7
    %v176 = vsub.s32 1, %v175
    %v177 = vrot.slane %v167, %v176
    %v178 = vmul.f32 %v154, %v173
    %v179 = vmul.f32 %v154, %v177
    %v180 = vmul.f32 %v158, %v173
    %v181 = vmul.f32 %v158, %v177
    %v182 = vadd.f32 %v148, %v178
    %v183 = vadd.f32 %v149, %v179
    %v184 = vadd.f32 %v150, %v180
    %v185 = vadd.f32 %v151, %v181
    %v186 = vld [vmem:[#allocation7] sm:$0xff]
    %v187 = vld [vmem:[#allocation7 + $0x8] sm:$0xff]
    %189 = vset.pattern.permute.xlu0 0
    %190 = vperm.xlu0 %189, %v186
    %v191 = vpop.permute.xlu0 %190
    %194 = vset.pattern.permute.xlu0 0
    %195 = vperm.xlu0 %194, %v187
    %v196 = vpop.permute.xlu0 %195
    %v198 = vadd.f32 %v182, %v191
    %v199 = vadd.f32 %v183, %v191
    %v200 = vadd.f32 %v184, %v196
    %v201 = vadd.f32 %v185, %v196
    %v202 = vmax.f32 %v198, 0.0
    %v203 = vmax.f32 %v199, 0.0
    %v204 = vmax.f32 %v200, 0.0
    %v205 = vmax.f32 %v201, 0.0
    %v206 = vld [vmem:[#allocation8] sm:$0xff]
    %v207 = vld [vmem:[#allocation8 + $0x8] sm:$0xff]
    %v208 = vld [vmem:[#allocation8 + $0x10] sm:$0xff]
    %v209 = vld [vmem:[#allocation8 + $0x18] sm:$0xff]
    %v210 = vld [vmem:[#allocation10] sm:$0xff]
    %v211 = vld [vmem:[#allocation10 + $0x8] sm:$0xff]
    %v212 = vld [vmem:[#allocation10 + $0x10] sm:$0xff]
    %v213 = vld [vmem:[#allocation10 + $0x18] sm:$0xff]
    %215 = vset.pattern.permute.xlu0 0
    %216 = vperm.xlu0 %215, %v210
    %v217 = vpop.permute.xlu0 %216
    %220 = vset.pattern.permute.xlu0 0
    %221 = vperm.xlu0 %220, %v211
    %v222 = vpop.permute.xlu0 %221
    %225 = vset.pattern.permute.xlu0 0
    %226 = vperm.xlu0 %225, %v212
    %v227 = vpop.permute.xlu0 %226
    %230 = vset.pattern.permute.xlu0 0
    %231 = vperm.xlu0 %230, %v213
    %v232 = vpop.permute.xlu0 %231
    %vm234 = vcmask 130048
    %v236 = vsel %vm234, %v206, 0
    %v239 = vsel %vm234, %v207, 0
    %v242 = vsel %vm234, %v208, 0
    %v245 = vsel %vm234, %v209, 0
    %247 = vmatprep.subr.mxu0 %v203
    %248 = vmatpush1.msra.mxu0 %v202
    %249 = vmatprep.subr.mxu0 %v205
    %250 = vmatpush1.msra.mxu0 %v204
    %251 = vmatprep.subr.mxu0 0.0
    %252 = vmatpush1.msra.mxu0 0.0
    %253 = vmatprep.subr.mxu0 0.0
    %254 = vmatpush1.msra.mxu0 0.0
    %255 = vmatprep.subr.mxu0 0.0
    %256 = vmatpush1.msra.mxu0 0.0
    %257 = vmatprep.subr.mxu0 0.0
    %258 = vmatpush1.msra.mxu0 0.0
    %259 = vmatprep.subr.mxu0 0.0
    %260 = vmatpush1.msra.mxu0 0.0
    %261 = vmatprep.subr.mxu0 0.0
    %262 = vmatpush1.msra.mxu0 0.0
    %263 = vmatprep.subr.mxu0 0.0
    %264 = vmatpush1.msra.mxu0 0.0
    %265 = vmatprep.subr.mxu0 0.0
    %266 = vmatpush1.msra.mxu0 0.0
    %267 = vmatprep.subr.mxu0 0.0
    %268 = vmatpush1.msra.mxu0 0.0
    %269 = vmatprep.subr.mxu0 0.0
    %270 = vmatpush1.msra.mxu0 0.0
    %271 = vmatprep.subr.mxu0 0.0
    %272 = vmatpush1.msra.mxu0 0.0
    %273 = vmatprep.subr.mxu0 0.0
    %274 = vmatpush1.msra.mxu0 0.0
    %275 = vmatprep.subr.mxu0 0.0
    %276 = vmatpush1.msra.mxu0 0.0
    %277 = vmatprep.subr.mxu0 0.0
    %278 = vmatpush1.msra.mxu0 0.0
    %279 = vmatprep.subr.mxu0 0.0
    %280 = vmatpush1.msra.mxu0 0.0
    %281 = vmatprep.subr.mxu0 0.0
    %282 = vmatpush1.msra.mxu0 0.0
    %283 = vmatprep.subr.mxu0 0.0
    %284 = vmatpush1.msra.mxu0 0.0
    %285 = vmatprep.subr.mxu0 0.0
    %286 = vmatpush1.msra.mxu0 0.0
    %287 = vmatprep.subr.mxu0 0.0
    %288 = vmatpush1.msra.mxu0 0.0
    %289 = vmatprep.subr.mxu0 0.0
    %290 = vmatpush1.msra.mxu0 0.0
    %291 = vmatprep.subr.mxu0 0.0
    %292 = vmatpush1.msra.mxu0 0.0
    %293 = vmatprep.subr.mxu0 0.0
    %294 = vmatpush1.msra.mxu0 0.0
    %295 = vmatprep.subr.mxu0 0.0
    %296 = vmatpush1.msra.mxu0 0.0
    %297 = vmatprep.subr.mxu0 0.0
    %298 = vmatpush1.msra.mxu0 0.0
    %299 = vmatprep.subr.mxu0 0.0
    %300 = vmatpush1.msra.mxu0 0.0
    %301 = vmatprep.subr.mxu0 0.0
    %302 = vmatpush1.msra.mxu0 0.0
    %303 = vmatprep.subr.mxu0 0.0
    %304 = vmatpush1.msra.mxu0 0.0
    %305 = vmatprep.subr.mxu0 0.0
    %306 = vmatpush1.msra.mxu0 0.0
    %307 = vmatprep.subr.mxu0 0.0
    %308 = vmatpush1.msra.mxu0 0.0
    %309 = vmatprep.subr.mxu0 0.0
    %310 = vmatpush1.msra.mxu0 0.0
    %311 = vmatprep.mubr.f32.mxu0 0.0
    %312 = vmatmul.mubr.f32.gmra.mrb[0].mxu0 %v236
    %v313 = vpop.f32.mrb[0].mxu0
    %v314 = vadd.f32 %v217, %v313
    %v315 = vpop.f32.mrb[0].mxu0
    %v316 = vadd.f32 %v217, %v315
    %317 = vmatprep.mubr.f32.mxu0 0.0
    %318 = vmatmul.mubr.f32.gmra.mrb[0].mxu0 %v239
    %v319 = vpop.f32.mrb[0].mxu0
    %v320 = vadd.f32 %v222, %v319
    %v321 = vpop.f32.mrb[0].mxu0
    %v322 = vadd.f32 %v222, %v321
    %323 = vmatprep.mubr.f32.mxu0 0.0
    %324 = vmatmul.mubr.f32.gmra.mrb[0].mxu0 %v242
    %v325 = vpop.f32.mrb[0].mxu0
    %v326 = vadd.f32 %v227, %v325
    %v327 = vpop.f32.mrb[0].mxu0
    %v328 = vadd.f32 %v227, %v327
    %329 = vmatprep.mubr.f32.mxu0 0.0
    %330 = vmatmul.mubr.f32.gmra.mrb[0].mxu0 %v245
    %v331 = vpop.f32.mrb[0].mxu0
    %v332 = vadd.f32 %v232, %v331
    %v333 = vpop.f32.mrb[0].mxu0
    %v334 = vadd.f32 %v232, %v333
    %335 = vdwg.mxu0
    %v336 = vmax.f32 %v314, 0.0
    %v337 = vmax.f32 %v316, 0.0
    %v338 = vmax.f32 %v320, 0.0
    %v339 = vmax.f32 %v322, 0.0
    %v340 = vmax.f32 %v326, 0.0
    %v341 = vmax.f32 %v328, 0.0
    %v342 = vmax.f32 %v332, 0.0
    %v343 = vmax.f32 %v334, 0.0
    %v344 = vld [vmem:[#allocation11] sm:$0x3]
    %v345 = vld [vmem:[#allocation13] sm:$0x3]
    %347 = vset.pattern.permute.xlu0 0
    %348 = vperm.xlu0 %347, %v345
    %v349 = vpop.permute.xlu0 %348
    %vm351 = vcmask 261120
    %v353 = vsel %vm351, %v344, 0
    %355 = vmatprep.subr.mxu0 %v337
    %356 = vmatpush1.msra.mxu0 %v336
    %357 = vmatprep.subr.mxu0 %v339
    %358 = vmatpush1.msra.mxu0 %v338
    %359 = vmatprep.subr.mxu0 %v341
    %360 = vmatpush1.msra.mxu0 %v340
    %361 = vmatprep.subr.mxu0 %v343
    %362 = vmatpush1.msra.mxu0 %v342
    %363 = vmatprep.subr.mxu0 0.0
    %364 = vmatpush1.msra.mxu0 0.0
    %365 = vmatprep.subr.mxu0 0.0
    %366 = vmatpush1.msra.mxu0 0.0
    %367 = vmatprep.subr.mxu0 0.0
    %368 = vmatpush1.msra.mxu0 0.0
    %369 = vmatprep.subr.mxu0 0.0
    %370 = vmatpush1.msra.mxu0 0.0
    %371 = vmatprep.subr.mxu0 0.0
    %372 = vmatpush1.msra.mxu0 0.0
    %373 = vmatprep.subr.mxu0 0.0
    %374 = vmatpush1.msra.mxu0 0.0
    %375 = vmatprep.subr.mxu0 0.0
    %376 = vmatpush1.msra.mxu0 0.0
    %377 = vmatprep.subr.mxu0 0.0
    %378 = vmatpush1.msra.mxu0 0.0
    %379 = vmatprep.subr.mxu0 0.0
    %380 = vmatpush1.msra.mxu0 0.0
    %381 = vmatprep.subr.mxu0 0.0
    %382 = vmatpush1.msra.mxu0 0.0
    %383 = vmatprep.subr.mxu0 0.0
    %384 = vmatpush1.msra.mxu0 0.0
    %385 = vmatprep.subr.mxu0 0.0
    %386 = vmatpush1.msra.mxu0 0.0
    %387 = vmatprep.subr.mxu0 0.0
    %388 = vmatpush1.msra.mxu0 0.0
    %389 = vmatprep.subr.mxu0 0.0
    %390 = vmatpush1.msra.mxu0 0.0
    %391 = vmatprep.subr.mxu0 0.0
    %392 = vmatpush1.msra.mxu0 0.0
    %393 = vmatprep.subr.mxu0 0.0
    %394 = vmatpush1.msra.mxu0 0.0
    %395 = vmatprep.subr.mxu0 0.0
    %396 = vmatpush1.msra.mxu0 0.0
    %397 = vmatprep.subr.mxu0 0.0
    %398 = vmatpush1.msra.mxu0 0.0
    %399 = vmatprep.subr.mxu0 0.0
    %400 = vmatpush1.msra.mxu0 0.0
    %401 = vmatprep.subr.mxu0 0.0
    %402 = vmatpush1.msra.mxu0 0.0
    %403 = vmatprep.subr.mxu0 0.0
    %404 = vmatpush1.msra.mxu0 0.0
    %405 = vmatprep.subr.mxu0 0.0
    %406 = vmatpush1.msra.mxu0 0.0
    %407 = vmatprep.subr.mxu0 0.0
    %408 = vmatpush1.msra.mxu0 0.0
    %409 = vmatprep.subr.mxu0 0.0
    %410 = vmatpush1.msra.mxu0 0.0
    %411 = vmatprep.subr.mxu0 0.0
    %412 = vmatpush1.msra.mxu0 0.0
    %413 = vmatprep.subr.mxu0 0.0
    %414 = vmatpush1.msra.mxu0 0.0
    %415 = vmatprep.subr.mxu0 0.0
    %416 = vmatpush1.msra.mxu0 0.0
    %417 = vmatprep.subr.mxu0 0.0
    %418 = vmatpush1.msra.mxu0 0.0
    %419 = vmatprep.mubr.f32.mxu0 0.0
    %420 = vmatmul.mubr.f32.gmra.mrb[0].mxu0 %v353
    %v421 = vpop.f32.mrb[0].mxu0
    %v422 = vadd.f32 %v349, %v421
    %v423 = vpop.f32.mrb[0].mxu0
    %v424 = vadd.f32 %v349, %v423
    %425 = vdwg.mxu0
    %v428 = vcombine.low %v422, %v424
    %v430 = vunpack.c.l.s4 1983009808
    %v431 = vunpack.c.0.s8 %v430
    %v432 = vlaneseq
    %v433 = vshrl.u32 %v432, 7
    %v434 = vsub.s32 %v431, %v433
    %v435 = vrot.slane %v428, %v434
    %437 = vst [vmem:[#allocation14] sm:$0xf] %v435
    // Predicated region
    $region58: #{generator_forward.1} parent=1 // pred_check
      _
    $region59: #{generator_forward.1} parent=1 // pred_check_branch
      %439 = sbr.rel (0) target = $region61
    $region60: #{generator_forward.1} parent=1 // pred_region
      %s441 = ssub.s32 64, 64
      %442 = vsyncadd [#allocation4], %s441
      %s444 = sshll.u32 [#allocation14], 4
      %s445 = int_to_ptr.vmem [resolvable:$true] %s444
      %447 = dma.vmem_to_hbm [thread:$0]  %s445, 64, %s7, [#allocation4]
    $region61: #{generator_forward.1} parent=1 // pred_fallthru
      _
    // Predicated region
    $region62: #{generator_forward.1} parent=1 // pred_check
      _
    $region63: #{generator_forward.1} parent=1 // pred_check_branch
      %449 = sbr.rel (0) target = $region65
    $region64: #{generator_forward.1} parent=1 // pred_region
      %450 = dma.done [#allocation4], 64
    $region65: #{generator_forward.1} parent=1 // pred_fallthru
      _
    %451 = vsyncpa [#allocation3], 1
    %452 = vsyncpa [#allocation6], 1
    %453 = vsyncpa [#allocation9], 1
    %454 = vsyncpa [#allocation12], 1
    %455 = vsyncpa [#allocation4], 1

</llo_original>
